<compile_context>
chip_gen: v7x
topology: tpu7x:2x2x1
jax: 0.10.0
libtpu: 0.0.40
codegen_flags: <defaults>
</compile_context>

<pallas_src>
import math

import jax
import jax.numpy as jnp
import numpy as np
from jax.experimental import pallas as pl
from jax.experimental.pallas import tpu as pltpu

_MIB = 1024 * 1024


def _vmem_capacity_bytes():
    """Physical VMEM capacity (generation-aware); conservative fallback."""
    try:
        return int(pltpu.get_tpu_info().vmem_capacity_bytes)
    except Exception:
        return 64 * _MIB    # assume v7x-sized VMEM if the query is unavailable


def _pick_tile(total, pref, max_fallback=4096):
    """Largest multiple-of-8 divisor of `total` that is <= pref (else total),
    guarded so an awkward S can't silently blow up the VMEM working set."""
    if total <= pref:
        return total
    t = pref - (pref % 8)
    while t >= 8:
        if total % t == 0:
            return t
        t -= 8
    if total > max_fallback:
        raise ValueError(
            f"S={total} has no multiple-of-8 tile <= {pref}; pad H*W or pass "
            "explicit tile sizes (a full-S tile would exceed the VMEM budget).")
    return total


# --------------------- Pass 1: GroupNorm statistics (tiled reduction) --------
def _gn_stats_kernel(x_ref, sums_ref, acc_ref):
    """Per-(sample, channel) sum / sum-of-squares over the token axis S."""
    t = pl.program_id(1)
    x = x_ref[0].astype(jnp.float32)                # (TS, C)
    s1 = jnp.sum(x, axis=0, keepdims=True)          # (1, C)
    s2 = jnp.sum(x * x, axis=0, keepdims=True)      # (1, C)

    @pl.when(t == 0)
    def _():
        acc_ref[...] = jnp.zeros(acc_ref.shape, acc_ref.dtype)

    acc_ref[...] += jnp.concatenate([s1, s2], axis=0)   # rows: [sum, sumsq]

    # Write the output block once, at the last reduction step.
    @pl.when(t == pl.num_programs(1) - 1)
    def _():
        sums_ref[0] = acc_ref[...]


# ------------- Pass 2: GroupNorm-apply + fused QKV projection ----------------
def _gn_qkv_kernel(x_ref, scale_ref, shift_ref, wqkv_ref, bqkv_ref,
                   q_ref, k_ref, v_ref):
    c = q_ref.shape[-1]
    x = x_ref[0].astype(jnp.float32)                              # (TP, C)
    xhat = (x * scale_ref[0] + shift_ref[0]).astype(jnp.bfloat16)
    qkv = jnp.dot(xhat, wqkv_ref[...],
                  preferred_element_type=jnp.float32) + bqkv_ref[...]   # (TP, 3C)
    q_ref[0] = qkv[:, :c].astype(jnp.bfloat16)      # already scaled by 1/sqrt(C)
    k_ref[0] = qkv[:, c:2 * c].astype(jnp.bfloat16)
    v_ref[0] = qkv[:, 2 * c:].astype(jnp.bfloat16)


# --------- Pass 3: flash attention + output projection + residual ------------
def _flash_attn_kernel(q_ref, k_ref, v_ref, x_ref, wo_ref, bo_ref, o_ref,
                       m_scratch, l_scratch, acc_scratch):
    kv = pl.program_id(2)

    @pl.when(kv == 0)
    def _():
        m_scratch[...] = jnp.full(m_scratch.shape, -jnp.inf, jnp.float32)
        l_scratch[...] = jnp.zeros(l_scratch.shape, jnp.float32)
        acc_scratch[...] = jnp.zeros(acc_scratch.shape, jnp.float32)

    # scores = (q * sm_scale) . k^T, contraction on channels (no explicit k.T).
    s = jax.lax.dot_general(q_ref[0], k_ref[0],
                            (((1,), (1,)), ((), ())),
                            preferred_element_type=jnp.float32)   # (TQ, TK)

    # Online-softmax update.
    m_prev = m_scratch[...]
    m_new = jnp.maximum(m_prev, jnp.max(s, axis=-1, keepdims=True))
    alpha = jnp.exp(m_prev - m_new)
    # exp in bf16: p feeds a bf16 MXU matmul anyway; ~2x EUP throughput on
    # v6e/v7x, promoted (harmless) on v5e.  alpha / l stay in f32.
    p = jnp.exp((s - m_new).astype(jnp.bfloat16))                 # (TQ, TK) bf16
    l_scratch[...] = alpha * l_scratch[...] + jnp.sum(
        p, axis=-1, keepdims=True, dtype=jnp.float32)
    acc_scratch[...] = alpha * acc_scratch[...] + jnp.dot(
        p, v_ref[0], preferred_element_type=jnp.float32)
    m_scratch[...] = m_new

    # Finalize: normalize once, output projection, residual add.
    @pl.when(kv == pl.num_programs(2) - 1)
    def _():
        attn = acc_scratch[...] * pl.reciprocal(l_scratch[...], approx=True)
        out = jnp.dot(attn.astype(jnp.bfloat16), wo_ref[...],
                      preferred_element_type=jnp.float32) + bo_ref[...]
        o_ref[0] = (x_ref[0].astype(jnp.float32) + out).astype(o_ref.dtype)


# ------------------------------- wrappers -------------------------------------
def vae_attention_block_nsc(x_nsc, params, *, num_groups=32, eps=1e-5,
                            tq=None, tk=None):
    """GroupNorm(32, C) + single-head self-attention + residual on (N, S, C)."""
    n, s, c = x_nsc.shape
    assert c % num_groups == 0

    gamma, beta = params["gamma"], params["beta"]
    w_in, b_in = params["w_in"], params["b_in"]          # (3C, C), (3C,)
    w_out, b_out = params["w_out"], params["b_out"]      # (C, C), (C,)

    vmem_cap = _vmem_capacity_bytes()
    big_vmem = vmem_cap >= 96 * _MIB      # 128 MiB parts (v5e/v6e) vs 64 MiB (v7x)

    if tq is None:
        tq = 512 if big_vmem else 256     # bigger q tiles only where VMEM allows
    if tk is None:
        tk = 512
    tq = _pick_tile(s, tq)
    tk = _pick_tile(s, tk)
    ts = _pick_tile(s, 1024)              # pass-1 reduction tile (HBM-bound)
    tp = _pick_tile(s, 512)               # pass-2 projection token tile

    # ---------------- pass 1: per-(sample, channel) sum / sumsq ----------------
    sums = pl.pallas_call(
        _gn_stats_kernel,
        out_shape=jax.ShapeDtypeStruct((n, 2, c), jnp.float32),
        grid_spec=pltpu.PrefetchScalarGridSpec(
            num_scalar_prefetch=0,
            grid=(n, s // ts),
            in_specs=[pl.BlockSpec((1, ts, c), lambda i, t: (i, t, 0))],
            out_specs=pl.BlockSpec((1, 2, c), lambda i, t: (i, 0, 0)),
            scratch_shapes=[pltpu.VMEM((2, c), jnp.float32)],
        ),
        compiler_params=pltpu.CompilerParams(
            dimension_semantics=("parallel", "arbitrary")),
    )(x_nsc)

    # Tiny O(N*C) glue: group stats -> folded per-channel affine (f32).
    # NOTE: E[x^2]-E[x]^2 in f32 can cancel for very-large-mean activations;
    # VAE activations are ~unit scale so this is fine at the stated tolerance.
    gsize = c // num_groups
    cnt = float(s * gsize)
    s1g = sums[:, 0, :].reshape(n, num_groups, gsize).sum(-1)
    s2g = sums[:, 1, :].reshape(n, num_groups, gsize).sum(-1)
    mean_g = s1g / cnt
    var_g = s2g / cnt - mean_g * mean_g
    inv_g = jax.lax.rsqrt(var_g + eps)
    mean_c = jnp.repeat(mean_g, gsize, axis=1)                      # (N, C)
    inv_c = jnp.repeat(inv_g, gsize, axis=1)                        # (N, C)
    scale_c = (inv_c * gamma[None, :]).reshape(n, 1, c).astype(jnp.float32)
    shift_c = (beta[None, :] - mean_c * inv_c * gamma[None, :]
               ).reshape(n, 1, c).astype(jnp.float32)

    # Weights: fused (C, 3C) QKV projection with 1/sqrt(C) folded into the Q
    # columns (single head -> d_head = C); bf16 MXU operands, f32 accumulation.
    sm_scale = 1.0 / math.sqrt(c)
    qscale = jnp.concatenate([jnp.full((c,), sm_scale, jnp.float32),
                              jnp.ones((2 * c,), jnp.float32)])
    w_qkv_t = (w_in.T.astype(jnp.float32) * qscale[None, :]).astype(jnp.bfloat16)
    b_qkv = (b_in.astype(jnp.float32) * qscale).reshape(1, 3 * c)
    wo_t = w_out.T.astype(jnp.bfloat16)                             # (C, C)
    bo = b_out.reshape(1, c).astype(jnp.float32)

    # ------------- pass 2: GroupNorm-apply + fused QKV projection --------------
    # Each token is normalized and projected exactly once (no per-q-tile redo).
    q_b, k_b, v_b = pl.pallas_call(
        _gn_qkv_kernel,
        out_shape=(jax.ShapeDtypeStruct((n, s, c), jnp.bfloat16),) * 3,
        grid_spec=pltpu.PrefetchScalarGridSpec(
            num_scalar_prefetch=0,
            grid=(n, s // tp),
            in_specs=[
                pl.BlockSpec((1, tp, c), lambda i, t: (i, t, 0)),    # x
                pl.BlockSpec((1, 1, c), lambda i, t: (i, 0, 0)),     # GN scale
                pl.BlockSpec((1, 1, c), lambda i, t: (i, 0, 0)),     # GN shift
                pl.BlockSpec(w_qkv_t.shape, lambda i, t: (0, 0)),    # W_qkv^T
                pl.BlockSpec(b_qkv.shape, lambda i, t: (0, 0)),      # b_qkv
            ],
            out_specs=[pl.BlockSpec((1, tp, c), lambda i, t: (i, t, 0))] * 3,
        ),
        compiler_params=pltpu.CompilerParams(
            dimension_semantics=("parallel", "parallel")),
    )(x_nsc, scale_c, shift_c, w_qkv_t, b_qkv)

    # --------- pass 3: flash attention + output projection + residual ----------
    f32, bf16 = 4, 2
    xb = x_nsc.dtype.itemsize
    est = (2 * (tq * c * bf16                 # q tile (double-buffered)
                + 2 * tk * c * bf16           # k, v tiles
                + tq * c * xb                 # residual x tile
                + tq * c * xb)                # output tile
           + 2 * (c * c * bf16 + c * f32)     # w_out / b_out
           + tq * c * f32 + 2 * tq * f32      # acc / m / l scratch
           + 2 * tq * tk * f32                # scores / probs temporaries
           + 2 * tq * c * f32)                # finalize temporaries
    # Generation-aware cap: leave Mosaic headroom (48 MiB on 128 MiB parts,
    # ~38 MiB on v7x's 64 MiB).
    vmem_cap_limit = 48 * _MIB if big_vmem else 38 * _MIB
    vmem_limit = int(min(max(2 * est, 16 * _MIB), vmem_cap_limit))

    const2d = lambda a: pl.BlockSpec(a.shape, lambda i, j, kv_: (0, 0))
    # TODO(synk): pipeline_mode=pl.Buffered(1) on the constant weight specs would
    # save one weight buffer of VMEM (helps v7x headroom); kept default for
    # portability.

    out_nsc = pl.pallas_call(
        _flash_attn_kernel,
        out_shape=jax.ShapeDtypeStruct((n, s, c), x_nsc.dtype),
        grid_spec=pltpu.PrefetchScalarGridSpec(
            num_scalar_prefetch=0,
            grid=(n, s // tq, s // tk),
            in_specs=[
                pl.BlockSpec((1, tq, c), lambda i, j, kv_: (i, j, 0)),    # q (pre-scaled)
                pl.BlockSpec((1, tk, c), lambda i, j, kv_: (i, kv_, 0)),  # k
                pl.BlockSpec((1, tk, c), lambda i, j, kv_: (i, kv_, 0)),  # v
                pl.BlockSpec((1, tq, c), lambda i, j, kv_: (i, j, 0)),    # x (residual)
                const2d(wo_t), const2d(bo),
            ],
            out_specs=pl.BlockSpec((1, tq, c), lambda i, j, kv_: (i, j, 0)),
            scratch_shapes=[
                pltpu.VMEM((tq, 1), jnp.float32),     # running max
                pltpu.VMEM((tq, 1), jnp.float32),     # running sum
                pltpu.VMEM((tq, c), jnp.float32),     # output accumulator
            ],
        ),
        compiler_params=pltpu.CompilerParams(
            dimension_semantics=("parallel", "parallel", "arbitrary"),
            vmem_limit_bytes=vmem_limit),
    )(q_b, k_b, v_b, x_nsc, wo_t, bo)

    return out_nsc


def vae_attention_block(x_nchw, params, *, num_groups=32, eps=1e-5,
                        tq=None, tk=None):
    """PyTorch-compatible NCHW interface."""
    # TODO(synk): surrounding VAE layers should keep (N, S, C) layout and call
    # vae_attention_block_nsc directly to avoid these two HBM transposes.
    n, c, h, w = x_nchw.shape
    x_nsc = jnp.transpose(x_nchw.reshape(n, c, h * w), (0, 2, 1))
    out_nsc = vae_attention_block_nsc(x_nsc, params, num_groups=num_groups,
                                      eps=eps, tq=tq, tk=tk)
    return jnp.transpose(out_nsc, (0, 2, 1)).reshape(n, c, h, w)


# ------------------------------ reference -------------------------------------
def reference(x, params, *, num_groups=32, eps=1e-5):
    """Pure-JAX f32 reference matching the PyTorch forward."""
    n, c, h, w = x.shape
    gamma, beta = params["gamma"], params["beta"]
    w_in, b_in = params["w_in"], params["b_in"]
    w_out, b_out = params["w_out"], params["b_out"]

    xg = x.reshape(n, num_groups, c // num_groups, h, w)
    mean = xg.mean(axis=(2, 3, 4), keepdims=True)
    var = xg.var(axis=(2, 3, 4), keepdims=True)
    xn = ((xg - mean) / jnp.sqrt(var + eps)).reshape(n, c, h, w)
    xn = xn * gamma.reshape(1, c, 1, 1) + beta.reshape(1, c, 1, 1)

    t = jnp.transpose(xn.reshape(n, c, h * w), (0, 2, 1))      # (N, S, C)
    qkv = t @ w_in.T + b_in
    q, k, v = qkv[..., :c], qkv[..., c:2 * c], qkv[..., 2 * c:]
    scores = (q @ jnp.transpose(k, (0, 2, 1))) / math.sqrt(c)
    p = jax.nn.softmax(scores, axis=-1)
    o = p @ v
    o = o @ w_out.T + b_out
    o = jnp.transpose(o, (0, 2, 1)).reshape(n, c, h, w)
    return x + o


if __name__ == "__main__":
    # Small but representative: C multiple of 32 (GroupNorm) and 128 (lanes),
    # S = 256 with tq = tk = 128 so the flash KV/Q tiling loop is exercised.
    N, C, H, W = 2, 128, 16, 16

    key = jax.random.PRNGKey(0)
    kx, kg, kb, kwi, kbi, kwo, kbo = jax.random.split(key, 7)

    x = jax.random.normal(kx, (N, C, H, W), dtype=jnp.float32)
    params = {
        "gamma": 1.0 + 0.1 * jax.random.normal(kg, (C,), dtype=jnp.float32),
        "beta": 0.1 * jax.random.normal(kb, (C,), dtype=jnp.float32),
        "w_in": 0.05 * jax.random.normal(kwi, (3 * C, C), dtype=jnp.float32),
        "b_in": 0.05 * jax.random.normal(kbi, (3 * C,), dtype=jnp.float32),
        "w_out": 0.05 * jax.random.normal(kwo, (C, C), dtype=jnp.float32),
        "b_out": 0.05 * jax.random.normal(kbo, (C,), dtype=jnp.float32),
    }

    out = jax.block_until_ready(vae_attention_block(x, params, tq=128, tk=128))
    ref = jax.block_until_ready(reference(x, params))

    assert out.shape == (N, C, H, W)
    # bf16 MXU operands / bf16 exp (f32 accumulation) -> bf16-level tolerance.
    np.testing.assert_allclose(np.asarray(out), np.asarray(ref),
                               rtol=2e-2, atol=2e-2)
    print("KERNEL_OK")
</pallas_src>

<mosaic_0001>
module attributes {stable_mosaic.version = 11 : i64} {
  func.func @_gn_stats_kernel(%arg0: i32, %arg1: i32, %arg2: memref<1x256x128xf32, #tpu.memory_space<vmem>>, %arg3: memref<1x2x128xf32, #tpu.memory_space<vmem>>, %arg4: memref<2x128xf32, #tpu.memory_space<vmem>>) attributes {dimension_semantics = [#tpu.dimension_semantics<parallel>, #tpu.dimension_semantics<arbitrary>], iteration_bounds = array<i64: 2, 1>, scalar_prefetch = 0 : i64, scratch_operands = 1 : i64, tpu.core_type = #tpu.core_type<tc>, window_params = [{transform_indices = @transform_0, window_bounds = array<i64: 1, 256, 128>}, {transform_indices = @transform_1, window_bounds = array<i64: 1, 2, 128>}]} {
    %c0 = arith.constant 0 : index
    %c0_0 = arith.constant 0 : index
    %c0_1 = arith.constant 0 : index
    %0 = vector.load %arg2[%c0, %c0_0, %c0_1] : memref<1x256x128xf32, #tpu.memory_space<vmem>>, vector<1x256x128xf32>
    %1 = vector.shape_cast %0 : vector<1x256x128xf32> to vector<256x128xf32>
    %cst = arith.constant dense<0.000000e+00> : vector<128xf32>
    %2 = vector.multi_reduction <add>, %1, %cst [0] : vector<256x128xf32> to vector<128xf32>
    %3 = vector.shape_cast %2 : vector<128xf32> to vector<1x128xf32>
    %4 = arith.mulf %1, %1 : vector<256x128xf32>
    %cst_2 = arith.constant dense<0.000000e+00> : vector<128xf32>
    %5 = vector.multi_reduction <add>, %4, %cst_2 [0] : vector<256x128xf32> to vector<128xf32>
    %6 = vector.shape_cast %5 : vector<128xf32> to vector<1x128xf32>
    %c0_i32 = arith.constant 0 : i32
    %7 = arith.cmpi eq, %arg1, %c0_i32 : i32
    %8 = arith.extui %7 : i1 to i32
    %c0_i32_3 = arith.constant 0 : i32
    %9 = arith.cmpi ne, %8, %c0_i32_3 : i32
    scf.if %9 {
      %cst_10 = arith.constant 0.000000e+00 : f32
      %17 = vector.broadcast %cst_10 : f32 to vector<2x128xf32>
      %c0_11 = arith.constant 0 : index
      %c0_12 = arith.constant 0 : index
      %18 = vector.load %arg4[%c0_11, %c0_12] : memref<2x128xf32, #tpu.memory_space<vmem>>, vector<2x128xf32>
      tpu.vector_store %arg4[%c0_11, %c0_12], %17 {strides = array<i32>} : memref<2x128xf32, #tpu.memory_space<vmem>>, vector<2x128xf32>,
    } else {
    }
    %c0_4 = arith.constant 0 : index
    %c0_5 = arith.constant 0 : index
    %10 = vector.load %arg4[%c0_4, %c0_5] : memref<2x128xf32, #tpu.memory_space<vmem>>, vector<2x128xf32>
    %11 = tpu.concatenate %3, %6 in 0 : vector<1x128xf32>, vector<1x128xf32> -> vector<2x128xf32>
    %12 = arith.addf %10, %11 : vector<2x128xf32>
    %c0_6 = arith.constant 0 : index
    %c0_7 = arith.constant 0 : index
    %13 = vector.load %arg4[%c0_6, %c0_7] : memref<2x128xf32, #tpu.memory_space<vmem>>, vector<2x128xf32>
    tpu.vector_store %arg4[%c0_6, %c0_7], %12 {strides = array<i32>} : memref<2x128xf32, #tpu.memory_space<vmem>>, vector<2x128xf32>,
    %c0_i32_8 = arith.constant 0 : i32
    %14 = arith.cmpi eq, %arg1, %c0_i32_8 : i32
    %15 = arith.extui %14 : i1 to i32
    %c0_i32_9 = arith.constant 0 : i32
    %16 = arith.cmpi ne, %15, %c0_i32_9 : i32
    scf.if %16 {
      %c0_10 = arith.constant 0 : index
      %c0_11 = arith.constant 0 : index
      %17 = vector.load %arg4[%c0_10, %c0_11] : memref<2x128xf32, #tpu.memory_space<vmem>>, vector<2x128xf32>
      %c0_12 = arith.constant 0 : index
      %c0_13 = arith.constant 0 : index
      %c0_14 = arith.constant 0 : index
      %18 = vector.load %arg3[%c0_12, %c0_13, %c0_14] : memref<1x2x128xf32, #tpu.memory_space<vmem>>, vector<1x2x128xf32>
      %19 = vector.shape_cast %18 : vector<1x2x128xf32> to vector<2x128xf32>
      %20 = vector.shape_cast %17 : vector<2x128xf32> to vector<1x2x128xf32>
      tpu.vector_store %arg3[%c0_12, %c0_13, %c0_14], %20 {strides = array<i32>} : memref<1x2x128xf32, #tpu.memory_space<vmem>>, vector<1x2x128xf32>,
    } else {
    }
    return
  }
  func.func @transform_0(%arg0: i32, %arg1: i32) -> (i32, i32, i32) {
    %c0_i32 = arith.constant 0 : i32
    %c0_i32_0 = arith.constant 0 : i32
    return %arg0, %arg1, %c0_i32 : i32, i32, i32
  }
  func.func @transform_1(%arg0: i32, %arg1: i32) -> (i32, i32, i32) {
    %c0_i32 = arith.constant 0 : i32
    %c0_i32_0 = arith.constant 0 : i32
    %c0_i32_1 = arith.constant 0 : i32
    return %arg0, %c0_i32, %c0_i32_0 : i32, i32, i32
  }
}

</mosaic_0001>

<llo_original>
// kernel: tpu_custom_call.1
$region0: #{tpu_custom_call.1}
  #allocation0 [shape = 'u32[]', space=smem, size = 0x4, offset = 0x4, fixed_abs, tag = 'smem constant byte address 0x4 - core index']
  #allocation1 [shape = 'u32[144,128]{1,0:T(1,128)}', space=vmem, size = 0x12000, scoped, tag = 'internal scratch']
  #allocation2 [shape = 'f32[2,128]{1,0:T(2,128)}', space=vmem, size = 0x400, scoped, tag = 'scratch operand']
  %s0 = inlined_call_operand.hbm [shape: f32[2,256,128], index: 0, kind: input, shape index: {}]
  %s1 = inlined_call_operand.hbm [shape: f32[2,2,128], index: 1, kind: output, shape index: {}]
  %s2 = sld [smem:[#allocation0]]
  $region49: #{tpu_custom_call.1} parent=0
    _
  %s4 = ssub.s32 1, %s2
  %s5 = scalar_select 0, %s4, %s2
  $region1: #{tpu_custom_call.1} parent=0
    #allocation3 [shape = 'u8[262144]{0}', space=vmem, size = 0x40000, scoped, tag = 'input window, operand 0']
    #allocation4 [shape = 's32[2]{0}', space=sflag, size = 0x8, scoped, tag = 'scoped memory for tpu_custom_call.1']
    #allocation5 [shape = 's32[2]{0}', space=sflag, size = 0x8, scoped, tag = 'scoped memory for tpu_custom_call.1']
    #allocation6 [shape = 'u8[2048]{0}', space=vmem, size = 0x800, scoped, tag = 'output window, operand 0']
    %6 = vsyncpa [#allocation4], 0
    %s7 = scalar_lea.sflag [#allocation4], 1
    %8 = vsyncpa %s7, 0
    %9 = vsyncpa [#allocation5], 0
    %s10 = scalar_lea.sflag [#allocation5], 1
    %11 = vsyncpa %s10, 0
    loop: start=0, step=1, limit=4
    $region2: #{tpu_custom_call.1} parent=1 // loop_pre_header
      _
    $region3: #{tpu_custom_call.1} parent=1 // loop_header
      %s13 = sphi 0, %s17
      %p14 = scmp.ge.s32.totalorder %s13, 4
      %s20 = sphi 0, %s32
      %s21 = sphi 0, %s28
      %s22 = sphi 0, %s20
      %s23 = sphi 0, %s21
      %s24 = sphi 0, %s22
      %s25 = sphi 0, %s23
      %s37 = sphi 0, %s39
      %s40 = sphi 0, %s37
      %s41 = sphi 0, %s40
      %s57 = sphi 0, %s41
      %s63 = sphi 0, %s65
      %s66 = sphi 0, %s63
      %s67 = sphi 0, %s66
      %s83 = sphi 0, %s67
    $region4: #{tpu_custom_call.1} parent=1 // loop_header_branch
      %16 = sbr.rel (%p14) target = $region8
    $region5: #{tpu_custom_call.1} parent=1 // loop_body
      %s18 = ssub.s32 %s13, 1
      %s19 = ssub.s32 %s13, 2
      %s26 = sadd.s32 1, %s21
      %p27 = scmp.ge.s32.totalorder %s26, 1
      %s28 = scalar_select %p27, 0, %s26
      %s29 = sadd.s32 1, %s20
      %s30 = scalar_select %p27, %s29, %s20
      %p31 = scmp.ge.s32.totalorder %s30, 2
      %s32 = scalar_select %p31, 0, %s30
      %s33 = ssub.s32 %s20, %s32
      %s34 = ssub.s32 %s21, %s28
      %s35 = sor.u32 %s33, %s34
      %p36 = scmp.eq.s32.totalorder %s35, 0
      %s38 = sadd.s32 %s37, 1
      %s39 = scalar_select %p36, %s37, %s38
      %p42 = pneg %p36
      %p43 = scmp.eq.s32.totalorder %s13, 1
      %p44 = por %p42, %p43
      %p45 = scmp.ne.s32.totalorder %s37, %s40
      %p46 = scmp.eq.s32.totalorder %s13, 0
      %p47 = por %p45, %p46
      %p48 = scmp.ne.s32.totalorder %s37, %s40
      %p49 = scmp.eq.s32.totalorder %s18, 1
      %p50 = por %p48, %p49
      %p51 = scmp.ne.s32.totalorder %s40, %s41
      %p52 = scmp.eq.s32.totalorder %s18, 0
      %p53 = por %p51, %p52
      %p54 = scmp.ne.s32.totalorder %s40, %s41
      %p55 = scmp.eq.s32.totalorder %s19, 1
      %p56 = por %p54, %p55
      %p58 = scmp.ne.s32.totalorder %s41, %s57
      %p59 = scmp.eq.s32.totalorder %s19, 0
      %p60 = por %p58, %p59
      %s61 = ssub.s32 %s20, %s32
      %p62 = scmp.eq.s32.totalorder %s61, 0
      %s64 = sadd.s32 %s63, 1
      %s65 = scalar_select %p62, %s63, %s64
      %p68 = pneg %p62
      %p69 = scmp.eq.s32.totalorder %s13, 1
      %p70 = por %p68, %p69
      %p71 = scmp.ne.s32.totalorder %s63, %s66
      %p72 = scmp.eq.s32.totalorder %s13, 0
      %p73 = por %p71, %p72
      %p74 = scmp.ne.s32.totalorder %s63, %s66
      %p75 = scmp.eq.s32.totalorder %s18, 1
      %p76 = por %p74, %p75
      %p77 = scmp.ne.s32.totalorder %s66, %s67
      %p78 = scmp.eq.s32.totalorder %s18, 0
      %p79 = por %p77, %p78
      %p80 = scmp.ne.s32.totalorder %s66, %s67
      %p81 = scmp.eq.s32.totalorder %s19, 1
      %p82 = por %p80, %p81
      %p84 = scmp.ne.s32.totalorder %s67, %s83
      %p85 = scmp.eq.s32.totalorder %s19, 0
      %p86 = por %p84, %p85
      %p87 = scmp.le.s32.totalorder 1, %s13
      %p88 = scmp.lt.s32.totalorder %s13, 3
      %p89 = pnand %p87, %p88
      %p90 = pneg %p89
      // Predicated region
      $region9: #{tpu_custom_call.1} parent=5 // pred_check
        _
      $region10: #{tpu_custom_call.1} parent=5 // pred_check_branch
        %92 = sbr.rel (%p89) target = $region12
      $region11: #{tpu_custom_call.1} parent=5 // pred_region
        %s93 = ssub.s32 %s13, 1
      $region12: #{tpu_custom_call.1} parent=5 // pred_fallthru
        _
      %p94 = scmp.lt.s32.totalorder %s13, 2
      // Predicated region
      $region13: #{tpu_custom_call.1} parent=5 // pred_check
        %p95 = pneg %p94
      $region14: #{tpu_custom_call.1} parent=5 // pred_check_branch
        %97 = sbr.rel (%p95) target = $region16
      $region15: #{tpu_custom_call.1} parent=5 // pred_region
        // Predicated region
        $region17: #{tpu_custom_call.1} parent=15 // pred_check
          %p98 = pneg %p47
        $region18: #{tpu_custom_call.1} parent=15 // pred_check_branch
          %100 = sbr.rel (%p98) target = $region20
        $region19: #{tpu_custom_call.1} parent=15 // pred_region
          %s101 = sand.u32 %s37, 1
          %s102 = scalar_lea.sflag [#allocation4], %s101
          %s103 = sand.u32 %s37, 1
          %s104 = smul.addr %s103, 256
          %s105 = scalar_lea.vmem [#allocation3], %s104
          %s106 = smul.u32 32, %s21
          %s108 = ssub.s32 4096, 4096
          %109 = vsyncadd %s102, %s108
          %s110 = smul.addr %s20, 32
          %s111 = sadd.s32 %s106, %s110
          %s112 = smul.addr %s111, 128
          %s113 = scalar_lea.hbm %s0, %s112
          %s114 = sshll.u32 %s105, 4
          %s115 = int_to_ptr.vmem [resolvable:$true] %s114
          %120 = dma.hbm_to_vmem [thread:$0]  %s113, 4096, %s115, %s102, 128, 128, 8
        $region20: #{tpu_custom_call.1} parent=15 // pred_fallthru
          _
      $region16: #{tpu_custom_call.1} parent=5 // pred_fallthru
        _
      %p121 = scmp.le.s32.totalorder 1, %s13
      %p122 = scmp.lt.s32.totalorder %s13, 3
      %p123 = pnand %p121, %p122
      %p124 = pneg %p123
      // Predicated region
      $region21: #{tpu_custom_call.1} parent=5 // pred_check
        _
      $region22: #{tpu_custom_call.1} parent=5 // pred_check_branch
        %126 = sbr.rel (%p123) target = $region24
      $region23: #{tpu_custom_call.1} parent=5 // pred_region
        %s127 = ssub.s32 %s13, 1
        %s128 = sand.u32 %s40, 1
        %s129 = scalar_lea.sflag [#allocation4], %s128
        %s130 = sand.u32 %s40, 1
        %s131 = smul.addr %s130, 256
        %s132 = scalar_lea.vmem [#allocation3], %s131
        // Predicated region
        $region25: #{tpu_custom_call.1} parent=23 // pred_check
          %p133 = pneg %p53
        $region26: #{tpu_custom_call.1} parent=23 // pred_check_branch
          %135 = sbr.rel (%p133) target = $region28
        $region27: #{tpu_custom_call.1} parent=23 // pred_region
          %136 = dma.done %s129, 4096
        $region28: #{tpu_custom_call.1} parent=23 // pred_fallthru
          _
        %s137 = sand.u32 %s40, 1
        %s138 = scalar_lea.sflag [#allocation4], %s137
        %s139 = sand.u32 %s40, 1
        %s140 = smul.addr %s139, 256
        %s141 = scalar_lea.vmem [#allocation3], %s140
        %p142 = pneg %p53
        %p143 = pneg %p50
        %p144 = pneg %p79
        %p145 = pneg %p76
        %s146 = sand.u32 %s66, 1
        %s147 = scalar_lea.sflag [#allocation5], %s146
        %s148 = sand.u32 %s66, 1
        %s149 = smul.addr %s148, 2
        %s150 = scalar_lea.vmem [#allocation6], %s149
        %s151 = smul.u32 32, %s23
        %v152 = vld [vmem:[%s132] sm:$0xff]
        %v153 = vld [vmem:[%s132 + $0x8] sm:$0xff]
        %v154 = vld [vmem:[%s132 + $0x10] sm:$0xff]
        %v155 = vld [vmem:[%s132 + $0x18] sm:$0xff]
        %v156 = vld [vmem:[%s132 + $0x20] sm:$0xff]
        %v157 = vld [vmem:[%s132 + $0x28] sm:$0xff]
        %v158 = vld [vmem:[%s132 + $0x30] sm:$0xff]
        %v159 = vld [vmem:[%s132 + $0x38] sm:$0xff]
        %v160 = vld [vmem:[%s132 + $0x40] sm:$0xff]
        %v161 = vld [vmem:[%s132 + $0x48] sm:$0xff]
        %v162 = vld [vmem:[%s132 + $0x50] sm:$0xff]
        %v163 = vld [vmem:[%s132 + $0x58] sm:$0xff]
        %v164 = vld [vmem:[%s132 + $0x60] sm:$0xff]
        %v165 = vld [vmem:[%s132 + $0x68] sm:$0xff]
        %v166 = vld [vmem:[%s132 + $0x70] sm:$0xff]
        %v167 = vld [vmem:[%s132 + $0x78] sm:$0xff]
        %v168 = vld [vmem:[%s132 + $0x80] sm:$0xff]
        %v169 = vld [vmem:[%s132 + $0x88] sm:$0xff]
        %v170 = vld [vmem:[%s132 + $0x90] sm:$0xff]
        %v171 = vld [vmem:[%s132 + $0x98] sm:$0xff]
        %v172 = vld [vmem:[%s132 + $0xa0] sm:$0xff]
        %v173 = vld [vmem:[%s132 + $0xa8] sm:$0xff]
        %v174 = vld [vmem:[%s132 + $0xb0] sm:$0xff]
        %v175 = vld [vmem:[%s132 + $0xb8] sm:$0xff]
        %v176 = vld [vmem:[%s132 + $0xc0] sm:$0xff]
        %v177 = vld [vmem:[%s132 + $0xc8] sm:$0xff]
        %v178 = vld [vmem:[%s132 + $0xd0] sm:$0xff]
        %v179 = vld [vmem:[%s132 + $0xd8] sm:$0xff]
        %v180 = vld [vmem:[%s132 + $0xe0] sm:$0xff]
        %v181 = vld [vmem:[%s132 + $0xe8] sm:$0xff]
        %v182 = vld [vmem:[%s132 + $0xf0] sm:$0xff]
        %v183 = vld [vmem:[%s132 + $0xf8] sm:$0xff]
        %v184 = vadd.f32 %v152, %v153
        %v185 = vadd.f32 %v184, %v154
        %v186 = vadd.f32 %v185, %v155
        %v187 = vadd.f32 %v186, %v156
        %v188 = vadd.f32 %v187, %v157
        %v189 = vadd.f32 %v188, %v158
        %v190 = vadd.f32 %v189, %v159
        %v191 = vadd.f32 %v190, %v160
        %v192 = vadd.f32 %v191, %v161
        %v193 = vadd.f32 %v192, %v162
        %v194 = vadd.f32 %v193, %v163
        %v195 = vadd.f32 %v194, %v164
        %v196 = vadd.f32 %v195, %v165
        %v197 = vadd.f32 %v196, %v166
        %v198 = vadd.f32 %v197, %v167
        %v199 = vadd.f32 %v198, %v168
        %v200 = vadd.f32 %v199, %v169
        %v201 = vadd.f32 %v200, %v170
        %v202 = vadd.f32 %v201, %v171
        %v203 = vadd.f32 %v202, %v172
        %v204 = vadd.f32 %v203, %v173
        %v205 = vadd.f32 %v204, %v174
        %v206 = vadd.f32 %v205, %v175
        %v207 = vadd.f32 %v206, %v176
        %v208 = vadd.f32 %v207, %v177
        %v209 = vadd.f32 %v208, %v178
        %v210 = vadd.f32 %v209, %v179
        %v211 = vadd.f32 %v210, %v180
        %v212 = vadd.f32 %v211, %v181
        %v213 = vadd.f32 %v212, %v182
        %v214 = vadd.f32 %v213, %v183
        %v215 = vrot.slane %v214, 4
        %v216 = vadd.f32 %v214, %v215
        %v217 = vrot.slane %v216, 2
        %v218 = vadd.f32 %v216, %v217
        %v219 = vrot.slane %v218, 1
        %v220 = vadd.f32 %v218, %v219
        %v221 = vmul.f32 %v152, %v152
        %v222 = vmul.f32 %v153, %v153
        %v223 = vmul.f32 %v154, %v154
        %v224 = vmul.f32 %v155, %v155
        %v225 = vmul.f32 %v156, %v156
        %v226 = vmul.f32 %v157, %v157
        %v227 = vmul.f32 %v158, %v158
        %v228 = vmul.f32 %v159, %v159
        %v229 = vmul.f32 %v160, %v160
        %v230 = vmul.f32 %v161, %v161
        %v231 = vmul.f32 %v162, %v162
        %v232 = vmul.f32 %v163, %v163
        %v233 = vmul.f32 %v164, %v164
        %v234 = vmul.f32 %v165, %v165
        %v235 = vmul.f32 %v166, %v166
        %v236 = vmul.f32 %v167, %v167
        %v237 = vmul.f32 %v168, %v168
        %v238 = vmul.f32 %v169, %v169
        %v239 = vmul.f32 %v170, %v170
        %v240 = vmul.f32 %v171, %v171
        %v241 = vmul.f32 %v172, %v172
        %v242 = vmul.f32 %v173, %v173
        %v243 = vmul.f32 %v174, %v174
        %v244 = vmul.f32 %v175, %v175
        %v245 = vmul.f32 %v176, %v176
        %v246 = vmul.f32 %v177, %v177
        %v247 = vmul.f32 %v178, %v178
        %v248 = vmul.f32 %v179, %v179
        %v249 = vmul.f32 %v180, %v180
        %v250 = vmul.f32 %v181, %v181
        %v251 = vmul.f32 %v182, %v182
        %v252 = vmul.f32 %v183, %v183
        %v253 = vadd.f32 %v221, %v222
        %v254 = vadd.f32 %v253, %v223
        %v255 = vadd.f32 %v254, %v224
        %v256 = vadd.f32 %v255, %v225
        %v257 = vadd.f32 %v256, %v226
        %v258 = vadd.f32 %v257, %v227
        %v259 = vadd.f32 %v258, %v228
        %v260 = vadd.f32 %v259, %v229
        %v261 = vadd.f32 %v260, %v230
        %v262 = vadd.f32 %v261, %v231
        %v263 = vadd.f32 %v262, %v232
        %v264 = vadd.f32 %v263, %v233
        %v265 = vadd.f32 %v264, %v234
        %v266 = vadd.f32 %v265, %v235
        %v267 = vadd.f32 %v266, %v236
        %v268 = vadd.f32 %v267, %v237
        %v269 = vadd.f32 %v268, %v238
        %v270 = vadd.f32 %v269, %v239
        %v271 = vadd.f32 %v270, %v240
        %v272 = vadd.f32 %v271, %v241
        %v273 = vadd.f32 %v272, %v242
        %v274 = vadd.f32 %v273, %v243
        %v275 = vadd.f32 %v274, %v244
        %v276 = vadd.f32 %v275, %v245
        %v277 = vadd.f32 %v276, %v246
        %v278 = vadd.f32 %v277, %v247
        %v279 = vadd.f32 %v278, %v248
        %v280 = vadd.f32 %v279, %v249
        %v281 = vadd.f32 %v280, %v250
        %v282 = vadd.f32 %v281, %v251
        %v283 = vadd.f32 %v282, %v252
        %v284 = vrot.slane %v283, 4
        %v285 = vadd.f32 %v283, %v284
        %v286 = vrot.slane %v285, 2
        %v287 = vadd.f32 %v285, %v286
        %v288 = vrot.slane %v287, 1
        %v289 = vadd.f32 %v287, %v288
        %p290 = scmp.eq.s32.totalorder %s23, 0
        // Predicated region
        $region29: #{tpu_custom_call.1} parent=23 // pred_check
          %p291 = pneg %p290
        $region30: #{tpu_custom_call.1} parent=23 // pred_check_branch
          %293 = sbr.rel (%p291) target = $region32
        $region31: #{tpu_custom_call.1} parent=23 // pred_region
          %294 = vst [vmem:[#allocation2] sm:$0x3] 0.0
        $region32: #{tpu_custom_call.1} parent=23 // pred_fallthru
          _
        %v295 = vld [vmem:[#allocation2] sm:$0x3]
        %vm296 = vcmask 1040384
        %v297 = vsel %vm296, %v220, %v289
        %v298 = vadd.f32 %v295, %v297
        %299 = vst [vmem:[#allocation2] sm:$0x3] %v298
        // Predicated region
        $region33: #{tpu_custom_call.1} parent=23 // pred_check
          %p300 = pneg %p290
        $region34: #{tpu_custom_call.1} parent=23 // pred_check_branch
          %302 = sbr.rel (%p300) target = $region36
        $region35: #{tpu_custom_call.1} parent=23 // pred_region
          %v303 = vld [vmem:[#allocation2] sm:$0x3]
          %304 = vst [vmem:[%s150] sm:$0x3] %v303
        $region36: #{tpu_custom_call.1} parent=23 // pred_fallthru
          _
        %s305 = sand.u32 %s66, 1
        %s306 = scalar_lea.sflag [#allocation5], %s305
        %s307 = sand.u32 %s66, 1
        %s308 = smul.addr %s307, 2
        %s309 = scalar_lea.vmem [#allocation6], %s308
        // Predicated region
        $region37: #{tpu_custom_call.1} parent=23 // pred_check
          %p310 = pneg %p76
        $region38: #{tpu_custom_call.1} parent=23 // pred_check_branch
          %312 = sbr.rel (%p310) target = $region40
        $region39: #{tpu_custom_call.1} parent=23 // pred_region
          %s314 = ssub.s32 32, 32
          %315 = vsyncadd %s306, %s314
          %s316 = smul.addr %s22, 32
          %s317 = scalar_lea.hbm %s1, %s316
          %s319 = sshll.u32 %s309, 4
          %s320 = int_to_ptr.vmem [resolvable:$true] %s319
          %322 = dma.vmem_to_hbm [thread:$0]  %s320, 32, %s317, %s306
        $region40: #{tpu_custom_call.1} parent=23 // pred_fallthru
          _
      $region24: #{tpu_custom_call.1} parent=5 // pred_fallthru
        _
      %p323 = scmp.le.s32.totalorder 2, %s13
      // Predicated region
      $region41: #{tpu_custom_call.1} parent=5 // pred_check
        %p324 = pneg %p323
      $region42: #{tpu_custom_call.1} parent=5 // pred_check_branch
        %326 = sbr.rel (%p324) target = $region44
      $region43: #{tpu_custom_call.1} parent=5 // pred_region
        %s327 = ssub.s32 %s13, 2
        // Predicated region
        $region45: #{tpu_custom_call.1} parent=43 // pred_check
          %p328 = pneg %p82
        $region46: #{tpu_custom_call.1} parent=43 // pred_check_branch
          %330 = sbr.rel (%p328) target = $region48
        $region47: #{tpu_custom_call.1} parent=43 // pred_region
          %s331 = sand.u32 %s67, 1
          %s332 = scalar_lea.sflag [#allocation5], %s331
          %s333 = sand.u32 %s67, 1
          %s334 = smul.addr %s333, 2
          %s335 = scalar_lea.vmem [#allocation6], %s334
          %336 = dma.done %s332, 32
        $region48: #{tpu_custom_call.1} parent=43 // pred_fallthru
          _
      $region44: #{tpu_custom_call.1} parent=5 // pred_fallthru
        _
    $region6: #{tpu_custom_call.1} parent=1 // loop_footer
      %s17 = sadd.s32 1, %s13
    $region7: #{tpu_custom_call.1} parent=1 // loop_footer_branch
      %12 = sbr.rel target = $region3
    $region8: #{tpu_custom_call.1} parent=1 // loop_exit
      _
    %337 = vsyncpa [#allocation4], 1
    %s338 = scalar_lea.sflag [#allocation4], 1
    %339 = vsyncpa %s338, 1
    %340 = vsyncpa [#allocation5], 1
    %s341 = scalar_lea.sflag [#allocation5], 1
    %342 = vsyncpa %s341, 1

</llo_original>
